<compile_context>
chip_gen: v5e
topology: v5e:2x2
jax: 0.10.0
libtpu: 0.0.40
codegen_flags: <defaults>
</compile_context>

<pallas_src>
import functools

import jax
import jax.numpy as jnp
from jax.experimental import pallas as pl
from jax.experimental.pallas import tpu as pltpu


def _disc_kernel(s_ref, a_ref, w1s_ref, w1a_ref, b1_ref, w2_ref, b2_ref,
                 w3_ref, b3_ref, out_ref):
    """One batch tile of the 3-layer MLP + sigmoid, entirely in VMEM."""
    # torch.FloatTensor(state) / torch.LongTensor(action) casts, in-kernel.
    s = s_ref[...].astype(jnp.float32).astype(jnp.bfloat16)               # (TB, S)
    # Note: discrete action indices > 256 lose exactness in bf16; typical
    # categorical action spaces are far smaller, matching the reference here.
    a = a_ref[...].astype(jnp.int32).astype(jnp.float32).astype(jnp.bfloat16)

    # Layer 1: concat([s, a], 1) @ W1  ==  s @ W1[:S] + a @ W1[S:]   (bf16 MXU)
    h1 = jnp.dot(s, w1s_ref[...], preferred_element_type=jnp.float32)
    h1 = h1 + jnp.dot(a, w1a_ref[...], preferred_element_type=jnp.float32)
    h1 = jnp.maximum(h1 + b1_ref[...], 0.0)                               # (TB, H) f32

    # Layer 2 (bf16 MXU, f32 accumulate) + bias/relu, then one bf16 down-cast
    # that feeds layer 3 directly.
    h2 = jnp.dot(h1.astype(jnp.bfloat16), w2_ref[...],
                 preferred_element_type=jnp.float32)
    h2 = jnp.maximum(h2 + b2_ref[...], 0.0).astype(jnp.bfloat16)          # (TB, H) bf16

    # Layer 3: lane-dense logits row.  w3 is padded to 8 sublanes (row 0 real);
    # both operands are bf16 (single MXU pass), contraction on dim 1 of both
    # gives (8, TB) directly with batch in the lane dimension, avoiding a
    # (TB, 1) masked-store output layout.
    logits8 = jax.lax.dot_general(
        w3_ref[...], h2,
        dimension_numbers=(((1,), (1,)), ((), ())),
        preferred_element_type=jnp.float32)                               # (8, TB)
    logits = logits8[0:1, :] + b3_ref[0]                                  # (1, TB)
    out_ref[...] = jax.nn.sigmoid(logits).astype(out_ref.dtype)


def _choose_batch_tile(batch, max_tile=1024):
    """Largest 128-multiple tile <= max_tile giving an even tile count >= 2.

    An even count >= 2 keeps both v7x TensorCores busy and balanced; on
    v5e/v6e (single TC) this is neutral.  Falls back to 128 for tiny batches.
    """
    for tile in range(max_tile, 127, -128):
        n = pl.cdiv(batch, tile)
        if n >= 2 and n % 2 == 0:
            return tile
    return 128


def prepare_params(params, state_dim):
    """One-time transform of raw f32 params into kernel-ready form.

    Do this at init / after each parameter update, NOT per forward call, so
    the bf16 casts, W1 split and w3 row-padding are not re-materialized in HBM
    on every forward.
    """
    w1, b1, w2, b2, w3, b3 = params        # weights (in, out); biases (1, out)
    H = w2.shape[0]
    w1s = w1[:state_dim].astype(jnp.bfloat16)              # (S, H)
    w1a = w1[state_dim:].astype(jnp.bfloat16)              # (A, H)
    b1f = b1.astype(jnp.float32)                           # (1, H)
    w2b = w2.astype(jnp.bfloat16)                          # (H, H)
    b2f = b2.astype(jnp.float32)                           # (1, H)
    # W3 as an 8-sublane row block (row 0 = real weights), bf16 for a single
    # MXU pass in layer 3.
    w3row = jnp.zeros((8, H), jnp.bfloat16).at[0].set(w3[:, 0].astype(jnp.bfloat16))
    b3s = jnp.asarray(b3).reshape(1).astype(jnp.float32)   # scalar -> SMEM
    return (w1s, w1a, b1f, w2b, b2f, w3row, b3s)


@functools.partial(jax.jit, static_argnames=("batch_tile",))
def discriminator_forward(state, action, prepped_params, batch_tile=None):
    """Pallas forward. state: (B, S); action: (B, A); params from prepare_params."""
    w1s, w1a, b1, w2b, b2, w3row, b3s = prepped_params

    B, S = state.shape
    A = action.shape[1]
    H = w2b.shape[0]
    assert w1s.shape[0] == S and w1a.shape[0] == A, "params / input dims mismatch"

    if batch_tile is None:
        batch_tile = _choose_batch_tile(B)
    assert batch_tile % 128 == 0, "keep the output lane-dense"

    num_tiles = pl.cdiv(B, batch_tile)
    B_pad = num_tiles * batch_tile
    if B_pad != B:
        # Pad instead of rejecting odd batches.  For large-B hot loops, feed
        # 128-multiple batches (or pad once outside) to skip this HBM copy.
        state = jnp.pad(state, ((0, B_pad - B), (0, 0)))
        action = jnp.pad(action, ((0, B_pad - B), (0, 0)))

    out = pl.pallas_call(
        _disc_kernel,
        out_shape=jax.ShapeDtypeStruct((1, B_pad), jnp.float32),
        grid_spec=pltpu.PrefetchScalarGridSpec(
            num_scalar_prefetch=0,
            grid=(num_tiles,),
            in_specs=[
                pl.BlockSpec((batch_tile, S), lambda i: (i, 0)),   # state tile
                pl.BlockSpec((batch_tile, A), lambda i: (i, 0)),   # action tile
                pl.BlockSpec((S, H), lambda i: (0, 0)),            # W1[:S]  (resident)
                pl.BlockSpec((A, H), lambda i: (0, 0)),            # W1[S:]  (resident)
                pl.BlockSpec((1, H), lambda i: (0, 0)),            # b1
                pl.BlockSpec((H, H), lambda i: (0, 0)),            # W2      (resident)
                pl.BlockSpec((1, H), lambda i: (0, 0)),            # b2
                pl.BlockSpec((8, H), lambda i: (0, 0)),            # W3 row (padded)
                pl.BlockSpec(memory_space=pltpu.MemorySpace.SMEM), # b3 scalar
            ],
            out_specs=pl.BlockSpec((1, batch_tile), lambda i: (0, i)),
        ),
        compiler_params=pltpu.CompilerParams(
            dimension_semantics=("parallel",),   # shard batch tiles across v7x TCs
        ),
    )(state, action, w1s, w1a, b1, w2b, b2, w3row, b3s)

    return out[0, :B].reshape(B, 1)


def init_params(key, state_dim, action_dim, hidden=256):
    """Deterministic PyTorch-style init: U(-1/sqrt(fan_in), 1/sqrt(fan_in))."""
    def linear(key, fan_in, fan_out):
        kw, kb = jax.random.split(key)
        bound = 1.0 / jnp.sqrt(fan_in)
        w = jax.random.uniform(kw, (fan_in, fan_out), jnp.float32, -bound, bound)
        b = jax.random.uniform(kb, (1, fan_out), jnp.float32, -bound, bound)
        return w, b

    k1, k2, k3 = jax.random.split(key, 3)
    w1, b1 = linear(k1, state_dim + action_dim, hidden)
    w2, b2 = linear(k2, hidden, hidden)
    w3, b3 = linear(k3, hidden, 1)
    return (w1, b1, w2, b2, w3, b3)


def reference_forward(state, action, params):
    """Pure-JAX f32 reference for correctness check."""
    w1, b1, w2, b2, w3, b3 = params
    sa = jnp.concatenate(
        [state.astype(jnp.float32), action.astype(jnp.int32).astype(jnp.float32)],
        axis=1)
    d = jax.nn.relu(sa @ w1 + b1)
    d = jax.nn.relu(d @ w2 + b2)
    d = d @ w3 + b3
    return jax.nn.sigmoid(d)


if __name__ == "__main__":
    key = jax.random.PRNGKey(0)
    k_param, k_state, k_action = jax.random.split(key, 3)

    batch = 200          # deliberately NOT a multiple of the tile -> padding path
    state_dim = 16
    action_dim = 4

    raw_params = init_params(k_param, state_dim, action_dim)
    # One-time, per-update param prep (hoisted out of the forward hot path).
    prepped = prepare_params(raw_params, state_dim)

    state = jax.random.normal(k_state, (batch, state_dim), jnp.float32)
    # discrete action indices (the module casts them to LongTensor)
    action = jax.random.randint(k_action, (batch, action_dim), 0, 5).astype(jnp.float32)

    # Auto tile choice -> 128 here (2 even grid tiles for the 2 v7x TCs).
    out = discriminator_forward(state, action, prepped)
    out = jax.block_until_ready(out)

    ref = reference_forward(state, action, raw_params)
    assert out.shape == (batch, 1)
    # bf16 MXU inputs with f32 accumulation -> ~1e-2 tolerance on sigmoid outputs.
    assert jnp.allclose(out, ref, atol=2e-2, rtol=2e-2), (
        float(jnp.max(jnp.abs(out - ref))))

    print("KERNEL_OK")
</pallas_src>

<mosaic_0001>
module attributes {stable_mosaic.version = 11 : i64} {
  func.func @_disc_kernel(%arg0: i32, %arg1: memref<128x16xf32, #tpu.memory_space<vmem>>, %arg2: memref<128x4xf32, #tpu.memory_space<vmem>>, %arg3: memref<16x256xbf16, #tpu.memory_space<vmem>>, %arg4: memref<4x256xbf16, #tpu.memory_space<vmem>>, %arg5: memref<1x256xf32, #tpu.memory_space<vmem>>, %arg6: memref<256x256xbf16, #tpu.memory_space<vmem>>, %arg7: memref<1x256xf32, #tpu.memory_space<vmem>>, %arg8: memref<8x256xbf16, #tpu.memory_space<vmem>>, %arg9: memref<1xf32, #tpu.memory_space<smem>>, %arg10: memref<1x128xf32, #tpu.memory_space<vmem>>) attributes {dimension_semantics = [#tpu.dimension_semantics<parallel>], iteration_bounds = array<i64: 2>, scalar_prefetch = 0 : i64, scratch_operands = 0 : i64, tpu.core_type = #tpu.core_type<tc>, window_params = [{transform_indices = @transform_0, window_bounds = array<i64: 128, 16>}, {transform_indices = @transform_1, window_bounds = array<i64: 128, 4>}, {pipeline_mode = #tpu.pipeline_mode<synchronous>, transform_indices = @transform_2, window_bounds = array<i64: 16, 256>}, {pipeline_mode = #tpu.pipeline_mode<synchronous>, transform_indices = @transform_3, window_bounds = array<i64: 4, 256>}, {pipeline_mode = #tpu.pipeline_mode<synchronous>, transform_indices = @transform_4, window_bounds = array<i64: 1, 256>}, {pipeline_mode = #tpu.pipeline_mode<synchronous>, transform_indices = @transform_5, window_bounds = array<i64: 256, 256>}, {pipeline_mode = #tpu.pipeline_mode<synchronous>, transform_indices = @transform_6, window_bounds = array<i64: 1, 256>}, {pipeline_mode = #tpu.pipeline_mode<synchronous>, transform_indices = @transform_7, window_bounds = array<i64: 8, 256>}, {transform_indices = @transform_8, window_bounds = array<i64: 1>}, {transform_indices = @transform_9, window_bounds = array<i64: 1, 128>}]} {
    %c0 = arith.constant 0 : index
    %c0_0 = arith.constant 0 : index
    %0 = vector.load %arg1[%c0, %c0_0] : memref<128x16xf32, #tpu.memory_space<vmem>>, vector<128x16xf32>
    %1 = arith.truncf %0 : vector<128x16xf32> to vector<128x16xbf16>
    %c0_1 = arith.constant 0 : index
    %c0_2 = arith.constant 0 : index
    %2 = vector.load %arg2[%c0_1, %c0_2] : memref<128x4xf32, #tpu.memory_space<vmem>>, vector<128x4xf32>
    %3 = arith.fptosi %2 : vector<128x4xf32> to vector<128x4xi32>
    %4 = arith.sitofp %3 : vector<128x4xi32> to vector<128x4xf32>
    %5 = arith.truncf %4 : vector<128x4xf32> to vector<128x4xbf16>
    %c0_3 = arith.constant 0 : index
    %c0_4 = arith.constant 0 : index
    %6 = vector.load %arg3[%c0_3, %c0_4] : memref<16x256xbf16, #tpu.memory_space<vmem>>, vector<16x256xbf16>
    %cst = arith.constant dense<0.000000e+00> : vector<128x256xf32>
    %7 = tpu.matmul %1, %6, %cst {dimension_numbers = #tpu.dot_dimension_numbers<[1], [0], [0], [1], [0, 0, 1, 1], [], []>} : vector<128x16xbf16>, vector<16x256xbf16>, vector<128x256xf32> -> vector<128x256xf32>
    %c0_5 = arith.constant 0 : index
    %c0_6 = arith.constant 0 : index
    %8 = vector.load %arg4[%c0_5, %c0_6] : memref<4x256xbf16, #tpu.memory_space<vmem>>, vector<4x256xbf16>
    %cst_7 = arith.constant dense<0.000000e+00> : vector<128x256xf32>
    %9 = tpu.matmul %5, %8, %cst_7 {dimension_numbers = #tpu.dot_dimension_numbers<[1], [0], [0], [1], [0, 0, 1, 1], [], []>} : vector<128x4xbf16>, vector<4x256xbf16>, vector<128x256xf32> -> vector<128x256xf32>
    %10 = arith.addf %7, %9 : vector<128x256xf32>
    %c0_8 = arith.constant 0 : index
    %c0_9 = arith.constant 0 : index
    %11 = vector.load %arg5[%c0_8, %c0_9] : memref<1x256xf32, #tpu.memory_space<vmem>>, vector<1x256xf32>
    %12 = vector.broadcast %11 : vector<1x256xf32> to vector<128x256xf32>
    %13 = arith.addf %10, %12 : vector<128x256xf32>
    %cst_10 = arith.constant 0.000000e+00 : f32
    %14 = vector.broadcast %cst_10 : f32 to vector<128x256xf32>
    %15 = arith.maximumf %13, %14 : vector<128x256xf32>
    %16 = arith.truncf %15 : vector<128x256xf32> to vector<128x256xbf16>
    %c0_11 = arith.constant 0 : index
    %c0_12 = arith.constant 0 : index
    %17 = vector.load %arg6[%c0_11, %c0_12] : memref<256x256xbf16, #tpu.memory_space<vmem>>, vector<256x256xbf16>
    %cst_13 = arith.constant dense<0.000000e+00> : vector<128x256xf32>
    %18 = tpu.matmul %16, %17, %cst_13 {dimension_numbers = #tpu.dot_dimension_numbers<[1], [0], [0], [1], [0, 0, 1, 1], [], []>} : vector<128x256xbf16>, vector<256x256xbf16>, vector<128x256xf32> -> vector<128x256xf32>
    %c0_14 = arith.constant 0 : index
    %c0_15 = arith.constant 0 : index
    %19 = vector.load %arg7[%c0_14, %c0_15] : memref<1x256xf32, #tpu.memory_space<vmem>>, vector<1x256xf32>
    %20 = vector.broadcast %19 : vector<1x256xf32> to vector<128x256xf32>
    %21 = arith.addf %18, %20 : vector<128x256xf32>
    %cst_16 = arith.constant 0.000000e+00 : f32
    %22 = vector.broadcast %cst_16 : f32 to vector<128x256xf32>
    %23 = arith.maximumf %21, %22 : vector<128x256xf32>
    %24 = arith.truncf %23 : vector<128x256xf32> to vector<128x256xbf16>
    %c0_17 = arith.constant 0 : index
    %c0_18 = arith.constant 0 : index
    %25 = vector.load %arg8[%c0_17, %c0_18] : memref<8x256xbf16, #tpu.memory_space<vmem>>, vector<8x256xbf16>
    %cst_19 = arith.constant dense<0.000000e+00> : vector<8x128xf32>
    %26 = tpu.matmul %25, %24, %cst_19 {dimension_numbers = #tpu.dot_dimension_numbers<[1], [1], [0], [0], [0, 0, 1, 0], [], []>} : vector<8x256xbf16>, vector<128x256xbf16>, vector<8x128xf32> -> vector<8x128xf32>
    %27 = vector.extract_strided_slice %26 {offsets = [0, 0], sizes = [1, 128], strides = [1, 1]} : vector<8x128xf32> to vector<1x128xf32>
    %c0_20 = arith.constant 0 : index
    %28 = memref.load %arg9[%c0_20] : memref<1xf32, #tpu.memory_space<smem>>
    %29 = vector.broadcast %28 : f32 to vector<1x128xf32>
    %30 = arith.addf %27, %29 : vector<1x128xf32>
    %31 = arith.negf %30 : vector<1x128xf32>
    %32 = math.exp %31 : vector<1x128xf32>
    %cst_21 = arith.constant 1.000000e+00 : f32
    %33 = vector.broadcast %cst_21 : f32 to vector<1x128xf32>
    %34 = arith.addf %33, %32 : vector<1x128xf32>
    %35 = arith.divf %33, %34 : vector<1x128xf32>
    %c0_22 = arith.constant 0 : index
    %c0_23 = arith.constant 0 : index
    %36 = vector.load %arg10[%c0_22, %c0_23] : memref<1x128xf32, #tpu.memory_space<vmem>>, vector<1x128xf32>
    tpu.vector_store %arg10[%c0_22, %c0_23], %35 {strides = array<i32>} : memref<1x128xf32, #tpu.memory_space<vmem>>, vector<1x128xf32>,
    return
  }
  func.func @transform_0(%arg0: i32) -> (i32, i32) {
    %c0_i32 = arith.constant 0 : i32
    %c0_i32_0 = arith.constant 0 : i32
    return %arg0, %c0_i32 : i32, i32
  }
  func.func @transform_1(%arg0: i32) -> (i32, i32) {
    %c0_i32 = arith.constant 0 : i32
    %c0_i32_0 = arith.constant 0 : i32
    return %arg0, %c0_i32 : i32, i32
  }
  func.func @transform_2(%arg0: i32) -> (i32, i32) {
    %c0_i32 = arith.constant 0 : i32
    %c0_i32_0 = arith.constant 0 : i32
    %c0_i32_1 = arith.constant 0 : i32
    return %c0_i32, %c0_i32_0 : i32, i32
  }
  func.func @transform_3(%arg0: i32) -> (i32, i32) {
    %c0_i32 = arith.constant 0 : i32
    %c0_i32_0 = arith.constant 0 : i32
    %c0_i32_1 = arith.constant 0 : i32
    return %c0_i32, %c0_i32_0 : i32, i32
  }
  func.func @transform_4(%arg0: i32) -> (i32, i32) {
    %c0_i32 = arith.constant 0 : i32
    %c0_i32_0 = arith.constant 0 : i32
    %c0_i32_1 = arith.constant 0 : i32
    return %c0_i32, %c0_i32_0 : i32, i32
  }
  func.func @transform_5(%arg0: i32) -> (i32, i32) {
    %c0_i32 = arith.constant 0 : i32
    %c0_i32_0 = arith.constant 0 : i32
    %c0_i32_1 = arith.constant 0 : i32
    return %c0_i32, %c0_i32_0 : i32, i32
  }
  func.func @transform_6(%arg0: i32) -> (i32, i32) {
    %c0_i32 = arith.constant 0 : i32
    %c0_i32_0 = arith.constant 0 : i32
    %c0_i32_1 = arith.constant 0 : i32
    return %c0_i32, %c0_i32_0 : i32, i32
  }
  func.func @transform_7(%arg0: i32) -> (i32, i32) {
    %c0_i32 = arith.constant 0 : i32
    %c0_i32_0 = arith.constant 0 : i32
    %c0_i32_1 = arith.constant 0 : i32
    return %c0_i32, %c0_i32_0 : i32, i32
  }
  func.func @transform_8(%arg0: i32) -> i32 {
    %c0_i32 = arith.constant 0 : i32
    %c0_i32_0 = arith.constant 0 : i32
    return %c0_i32 : i32
  }
  func.func @transform_9(%arg0: i32) -> (i32, i32) {
    %c0_i32 = arith.constant 0 : i32
    %c0_i32_0 = arith.constant 0 : i32
    return %c0_i32, %arg0 : i32, i32
  }
}

</mosaic_0001>

<llo_original>
// kernel: discriminator_forward.1
$region0: #{discriminator_forward.1}
  #allocation0 [shape = 'u32[]', space=smem, size = 0x4, offset = 0x4, fixed_abs, tag = 'smem constant byte address 0x4 - core index']
  #allocation1 [shape = 'u32[72,128]{1,0:T(1,128)}', space=vmem, size = 0x9000, scoped, tag = 'internal scratch']
  #allocation2 [shape = 'f32[1]{0:T(128)S(6)}', space=smem, size = 0x200, scoped, tag = 'scoped memory for discriminator_forward.1']
  %s0 = inlined_call_operand.vmem [shape: f32[256,16], index: 0, kind: input, shape index: {}]
  %s1 = inlined_call_operand.vmem [shape: f32[256,4], index: 1, kind: input, shape index: {}]
  %s2 = inlined_call_operand.vmem [shape: bf16[16,256], index: 2, kind: input, shape index: {}]
  %s3 = inlined_call_operand.vmem [shape: bf16[4,256], index: 3, kind: input, shape index: {}]
  %s4 = inlined_call_operand.vmem [shape: f32[1,256], index: 4, kind: input, shape index: {}]
  %s5 = inlined_call_operand.vmem [shape: bf16[256,256], index: 5, kind: input, shape index: {}]
  %s6 = inlined_call_operand.vmem [shape: f32[1,256], index: 6, kind: input, shape index: {}]
  %s7 = inlined_call_operand.vmem [shape: bf16[8,256], index: 7, kind: input, shape index: {}]
  %s8 = inlined_call_operand.<no memory space> [shape: f32[1], index: 8, kind: input, shape index: {}]
  %s9 = inlined_call_operand.vmem [shape: f32[1,256], index: 9, kind: output, shape index: {}]
  %s10 = sld [smem:[#allocation0]]
  $region69: #{discriminator_forward.1} parent=0
    _
  %s12 = ssub.s32 1, %s10
  %s13 = scalar_select 0, %s12, %s10
  %14 = sst [smem:[#allocation2]] %s8
  loop: start=0, step=1, limit=4
  $region2: #{discriminator_forward.1} parent=0 // loop_pre_header
    _
  $region3: #{discriminator_forward.1} parent=0 // loop_header
    %s16 = sphi 0, %s20
    %p17 = scmp.ge.s32.totalorder %s16, 4
    %s26 = sphi 0, %s28
    %s29 = sphi 0, %s26
    %s30 = sphi 0, %s29
    %s46 = sphi 0, %s30
    %s52 = sphi 0, %s54
    %s55 = sphi 0, %s52
    %s56 = sphi 0, %s55
    %s72 = sphi 0, %s56
    %s76 = sphi 0, %s76
    %s78 = sphi 0, %s76
    %s79 = sphi 0, %s78
    %s93 = sphi 0, %s79
    %s97 = sphi 0, %s97
    %s99 = sphi 0, %s97
    %s100 = sphi 0, %s99
    %s114 = sphi 0, %s100
    %s118 = sphi 0, %s118
    %s120 = sphi 0, %s118
    %s121 = sphi 0, %s120
    %s135 = sphi 0, %s121
    %s139 = sphi 0, %s139
    %s141 = sphi 0, %s139
    %s142 = sphi 0, %s141
    %s156 = sphi 0, %s142
    %s160 = sphi 0, %s160
    %s162 = sphi 0, %s160
    %s163 = sphi 0, %s162
    %s177 = sphi 0, %s163
    %s181 = sphi 0, %s181
    %s183 = sphi 0, %s181
    %s184 = sphi 0, %s183
    %s198 = sphi 0, %s184
    %s202 = sphi 0, %s202
    %s204 = sphi 0, %s202
    %s205 = sphi 0, %s204
    %s219 = sphi 0, %s205
    %s225 = sphi 0, %s227
    %s228 = sphi 0, %s225
    %s229 = sphi 0, %s228
    %s245 = sphi 0, %s229
  $region4: #{discriminator_forward.1} parent=0 // loop_header_branch
    %19 = sbr.rel (%p17) target = $region8
  $region5: #{discriminator_forward.1} parent=0 // loop_body
    %s21 = ssub.s32 %s16, 1
    %s22 = ssub.s32 %s16, 2
    %s23 = sadd.s32 %s16, 1
    %s24 = ssub.s32 %s16, %s23
    %p25 = scmp.eq.s32.totalorder %s24, 0
    %s27 = sadd.s32 %s26, 1
    %s28 = scalar_select %p25, %s26, %s27
    %p31 = pneg %p25
    %p32 = scmp.eq.s32.totalorder %s16, 1
    %p33 = por %p31, %p32
    %p34 = scmp.ne.s32.totalorder %s26, %s29
    %p35 = scmp.eq.s32.totalorder %s16, 0
    %p36 = por %p34, %p35
    %p37 = scmp.ne.s32.totalorder %s26, %s29
    %p38 = scmp.eq.s32.totalorder %s21, 1
    %p39 = por %p37, %p38
    %p40 = scmp.ne.s32.totalorder %s29, %s30
    %p41 = scmp.eq.s32.totalorder %s21, 0
    %p42 = por %p40, %p41
    %p43 = scmp.ne.s32.totalorder %s29, %s30
    %p44 = scmp.eq.s32.totalorder %s22, 1
    %p45 = por %p43, %p44
    %p47 = scmp.ne.s32.totalorder %s30, %s46
    %p48 = scmp.eq.s32.totalorder %s22, 0
    %p49 = por %p47, %p48
    %s50 = ssub.s32 %s16, %s23
    %p51 = scmp.eq.s32.totalorder %s50, 0
    %s53 = sadd.s32 %s52, 1
    %s54 = scalar_select %p51, %s52, %s53
    %p57 = pneg %p51
    %p58 = scmp.eq.s32.totalorder %s16, 1
    %p59 = por %p57, %p58
    %p60 = scmp.ne.s32.totalorder %s52, %s55
    %p61 = scmp.eq.s32.totalorder %s16, 0
    %p62 = por %p60, %p61
    %p63 = scmp.ne.s32.totalorder %s52, %s55
    %p64 = scmp.eq.s32.totalorder %s21, 1
    %p65 = por %p63, %p64
    %p66 = scmp.ne.s32.totalorder %s55, %s56
    %p67 = scmp.eq.s32.totalorder %s21, 0
    %p68 = por %p66, %p67
    %p69 = scmp.ne.s32.totalorder %s55, %s56
    %p70 = scmp.eq.s32.totalorder %s22, 1
    %p71 = por %p69, %p70
    %p73 = scmp.ne.s32.totalorder %s56, %s72
    %p74 = scmp.eq.s32.totalorder %s22, 0
    %p75 = por %p73, %p74
    %s77 = sadd.s32 %s76, 1
    %p80 = scmp.eq.s32.totalorder %s16, 1
    %p81 = scmp.ne.s32.totalorder %s76, %s78
    %p82 = scmp.eq.s32.totalorder %s16, 0
    %p83 = por %p81, %p82
    %p84 = scmp.ne.s32.totalorder %s76, %s78
    %p85 = scmp.eq.s32.totalorder %s21, 1
    %p86 = por %p84, %p85
    %p87 = scmp.ne.s32.totalorder %s78, %s79
    %p88 = scmp.eq.s32.totalorder %s21, 0
    %p89 = por %p87, %p88
    %p90 = scmp.ne.s32.totalorder %s78, %s79
    %p91 = scmp.eq.s32.totalorder %s22, 1
    %p92 = por %p90, %p91
    %p94 = scmp.ne.s32.totalorder %s79, %s93
    %p95 = scmp.eq.s32.totalorder %s22, 0
    %p96 = por %p94, %p95
    %s98 = sadd.s32 %s97, 1
    %p101 = scmp.eq.s32.totalorder %s16, 1
    %p102 = scmp.ne.s32.totalorder %s97, %s99
    %p103 = scmp.eq.s32.totalorder %s16, 0
    %p104 = por %p102, %p103
    %p105 = scmp.ne.s32.totalorder %s97, %s99
    %p106 = scmp.eq.s32.totalorder %s21, 1
    %p107 = por %p105, %p106
    %p108 = scmp.ne.s32.totalorder %s99, %s100
    %p109 = scmp.eq.s32.totalorder %s21, 0
    %p110 = por %p108, %p109
    %p111 = scmp.ne.s32.totalorder %s99, %s100
    %p112 = scmp.eq.s32.totalorder %s22, 1
    %p113 = por %p111, %p112
    %p115 = scmp.ne.s32.totalorder %s100, %s114
    %p116 = scmp.eq.s32.totalorder %s22, 0
    %p117 = por %p115, %p116
    %s119 = sadd.s32 %s118, 1
    %p122 = scmp.eq.s32.totalorder %s16, 1
    %p123 = scmp.ne.s32.totalorder %s118, %s120
    %p124 = scmp.eq.s32.totalorder %s16, 0
    %p125 = por %p123, %p124
    %p126 = scmp.ne.s32.totalorder %s118, %s120
    %p127 = scmp.eq.s32.totalorder %s21, 1
    %p128 = por %p126, %p127
    %p129 = scmp.ne.s32.totalorder %s120, %s121
    %p130 = scmp.eq.s32.totalorder %s21, 0
    %p131 = por %p129, %p130
    %p132 = scmp.ne.s32.totalorder %s120, %s121
    %p133 = scmp.eq.s32.totalorder %s22, 1
    %p134 = por %p132, %p133
    %p136 = scmp.ne.s32.totalorder %s121, %s135
    %p137 = scmp.eq.s32.totalorder %s22, 0
    %p138 = por %p136, %p137
    %s140 = sadd.s32 %s139, 1
    %p143 = scmp.eq.s32.totalorder %s16, 1
    %p144 = scmp.ne.s32.totalorder %s139, %s141
    %p145 = scmp.eq.s32.totalorder %s16, 0
    %p146 = por %p144, %p145
    %p147 = scmp.ne.s32.totalorder %s139, %s141
    %p148 = scmp.eq.s32.totalorder %s21, 1
    %p149 = por %p147, %p148
    %p150 = scmp.ne.s32.totalorder %s141, %s142
    %p151 = scmp.eq.s32.totalorder %s21, 0
    %p152 = por %p150, %p151
    %p153 = scmp.ne.s32.totalorder %s141, %s142
    %p154 = scmp.eq.s32.totalorder %s22, 1
    %p155 = por %p153, %p154
    %p157 = scmp.ne.s32.totalorder %s142, %s156
    %p158 = scmp.eq.s32.totalorder %s22, 0
    %p159 = por %p157, %p158
    %s161 = sadd.s32 %s160, 1
    %p164 = scmp.eq.s32.totalorder %s16, 1
    %p165 = scmp.ne.s32.totalorder %s160, %s162
    %p166 = scmp.eq.s32.totalorder %s16, 0
    %p167 = por %p165, %p166
    %p168 = scmp.ne.s32.totalorder %s160, %s162
    %p169 = scmp.eq.s32.totalorder %s21, 1
    %p170 = por %p168, %p169
    %p171 = scmp.ne.s32.totalorder %s162, %s163
    %p172 = scmp.eq.s32.totalorder %s21, 0
    %p173 = por %p171, %p172
    %p174 = scmp.ne.s32.totalorder %s162, %s163
    %p175 = scmp.eq.s32.totalorder %s22, 1
    %p176 = por %p174, %p175
    %p178 = scmp.ne.s32.totalorder %s163, %s177
    %p179 = scmp.eq.s32.totalorder %s22, 0
    %p180 = por %p178, %p179
    %s182 = sadd.s32 %s181, 1
    %p185 = scmp.eq.s32.totalorder %s16, 1
    %p186 = scmp.ne.s32.totalorder %s181, %s183
    %p187 = scmp.eq.s32.totalorder %s16, 0
    %p188 = por %p186, %p187
    %p189 = scmp.ne.s32.totalorder %s181, %s183
    %p190 = scmp.eq.s32.totalorder %s21, 1
    %p191 = por %p189, %p190
    %p192 = scmp.ne.s32.totalorder %s183, %s184
    %p193 = scmp.eq.s32.totalorder %s21, 0
    %p194 = por %p192, %p193
    %p195 = scmp.ne.s32.totalorder %s183, %s184
    %p196 = scmp.eq.s32.totalorder %s22, 1
    %p197 = por %p195, %p196
    %p199 = scmp.ne.s32.totalorder %s184, %s198
    %p200 = scmp.eq.s32.totalorder %s22, 0
    %p201 = por %p199, %p200
    %s203 = sadd.s32 %s202, 1
    %p206 = scmp.eq.s32.totalorder %s16, 1
    %p207 = scmp.ne.s32.totalorder %s202, %s204
    %p208 = scmp.eq.s32.totalorder %s16, 0
    %p209 = por %p207, %p208
    %p210 = scmp.ne.s32.totalorder %s202, %s204
    %p211 = scmp.eq.s32.totalorder %s21, 1
    %p212 = por %p210, %p211
    %p213 = scmp.ne.s32.totalorder %s204, %s205
    %p214 = scmp.eq.s32.totalorder %s21, 0
    %p215 = por %p213, %p214
    %p216 = scmp.ne.s32.totalorder %s204, %s205
    %p217 = scmp.eq.s32.totalorder %s22, 1
    %p218 = por %p216, %p217
    %p220 = scmp.ne.s32.totalorder %s205, %s219
    %p221 = scmp.eq.s32.totalorder %s22, 0
    %p222 = por %p220, %p221
    %s223 = ssub.s32 %s16, %s23
    %p224 = scmp.eq.s32.totalorder %s223, 0
    %s226 = sadd.s32 %s225, 1
    %s227 = scalar_select %p224, %s225, %s226
    %p230 = pneg %p224
    %p231 = scmp.eq.s32.totalorder %s16, 1
    %p232 = por %p230, %p231
    %p233 = scmp.ne.s32.totalorder %s225, %s228
    %p234 = scmp.eq.s32.totalorder %s16, 0
    %p235 = por %p233, %p234
    %p236 = scmp.ne.s32.totalorder %s225, %s228
    %p237 = scmp.eq.s32.totalorder %s21, 1
    %p238 = por %p236, %p237
    %p239 = scmp.ne.s32.totalorder %s228, %s229
    %p240 = scmp.eq.s32.totalorder %s21, 0
    %p241 = por %p239, %p240
    %p242 = scmp.ne.s32.totalorder %s228, %s229
    %p243 = scmp.eq.s32.totalorder %s22, 1
    %p244 = por %p242, %p243
    %p246 = scmp.ne.s32.totalorder %s229, %s245
    %p247 = scmp.eq.s32.totalorder %s22, 0
    %p248 = por %p246, %p247
    %p249 = scmp.le.s32.totalorder 1, %s16
    %p250 = scmp.lt.s32.totalorder %s16, 3
    %p251 = pnand %p249, %p250
    %p252 = pneg %p251
    // Predicated region
    $region9: #{discriminator_forward.1} parent=5 // pred_check
      _
    $region10: #{discriminator_forward.1} parent=5 // pred_check_branch
      %254 = sbr.rel (%p251) target = $region12
    $region11: #{discriminator_forward.1} parent=5 // pred_region
      %s255 = ssub.s32 %s16, 1
      // Predicated region
      $region13: #{discriminator_forward.1} parent=11 // pred_check
        %p256 = pneg %p89
      $region14: #{discriminator_forward.1} parent=11 // pred_check_branch
        %258 = sbr.rel (%p256) target = $region16
      $region15: #{discriminator_forward.1} parent=11 // pred_region
        _
      $region16: #{discriminator_forward.1} parent=11 // pred_fallthru
        _
      // Predicated region
      $region17: #{discriminator_forward.1} parent=11 // pred_check
        %p259 = pneg %p110
      $region18: #{discriminator_forward.1} parent=11 // pred_check_branch
        %261 = sbr.rel (%p259) target = $region20
      $region19: #{discriminator_forward.1} parent=11 // pred_region
        _
      $region20: #{discriminator_forward.1} parent=11 // pred_fallthru
        _
      // Predicated region
      $region21: #{discriminator_forward.1} parent=11 // pred_check
        %p262 = pneg %p131
      $region22: #{discriminator_forward.1} parent=11 // pred_check_branch
        %264 = sbr.rel (%p262) target = $region24
      $region23: #{discriminator_forward.1} parent=11 // pred_region
        _
      $region24: #{discriminator_forward.1} parent=11 // pred_fallthru
        _
      // Predicated region
      $region25: #{discriminator_forward.1} parent=11 // pred_check
        %p265 = pneg %p152
      $region26: #{discriminator_forward.1} parent=11 // pred_check_branch
        %267 = sbr.rel (%p265) target = $region28
      $region27: #{discriminator_forward.1} parent=11 // pred_region
        _
      $region28: #{discriminator_forward.1} parent=11 // pred_fallthru
        _
      // Predicated region
      $region29: #{discriminator_forward.1} parent=11 // pred_check
        %p268 = pneg %p173
      $region30: #{discriminator_forward.1} parent=11 // pred_check_branch
        %270 = sbr.rel (%p268) target = $region32
      $region31: #{discriminator_forward.1} parent=11 // pred_region
        _
      $region32: #{discriminator_forward.1} parent=11 // pred_fallthru
        _
      // Predicated region
      $region33: #{discriminator_forward.1} parent=11 // pred_check
        %p271 = pneg %p194
      $region34: #{discriminator_forward.1} parent=11 // pred_check_branch
        %273 = sbr.rel (%p271) target = $region36
      $region35: #{discriminator_forward.1} parent=11 // pred_region
        _
      $region36: #{discriminator_forward.1} parent=11 // pred_fallthru
        _
      // Predicated region
      $region37: #{discriminator_forward.1} parent=11 // pred_check
        %p274 = pneg %p215
      $region38: #{discriminator_forward.1} parent=11 // pred_check_branch
        %276 = sbr.rel (%p274) target = $region40
      $region39: #{discriminator_forward.1} parent=11 // pred_region
        _
      $region40: #{discriminator_forward.1} parent=11 // pred_fallthru
        _
    $region12: #{discriminator_forward.1} parent=5 // pred_fallthru
      _
    %p277 = scmp.lt.s32.totalorder %s16, 2
    // Predicated region
    $region41: #{discriminator_forward.1} parent=5 // pred_check
      %p278 = pneg %p277
    $region42: #{discriminator_forward.1} parent=5 // pred_check_branch
      %280 = sbr.rel (%p278) target = $region44
    $region43: #{discriminator_forward.1} parent=5 // pred_region
      // Predicated region
      $region45: #{discriminator_forward.1} parent=43 // pred_check
        %p281 = pneg %p36
      $region46: #{discriminator_forward.1} parent=43 // pred_check_branch
        %283 = sbr.rel (%p281) target = $region48
      $region47: #{discriminator_forward.1} parent=43 // pred_region
        %s284 = smul.u32 16, %s16
        %p285 = scmp.lt.s32.totalorder %s284, 31
        %s286 = scalar_select %p285, %s284, 31
        %s287 = smul.addr %s286, 8
        %s288 = scalar_lea.vmem %s0, %s287
        %s289 = smul.u32 16, %s16
      $region48: #{discriminator_forward.1} parent=43 // pred_fallthru
        _
      // Predicated region
      $region49: #{discriminator_forward.1} parent=43 // pred_check
        %p290 = pneg %p62
      $region50: #{discriminator_forward.1} parent=43 // pred_check_branch
        %292 = sbr.rel (%p290) target = $region52
      $region51: #{discriminator_forward.1} parent=43 // pred_region
        %s293 = smul.u32 16, %s16
        %p294 = scmp.lt.s32.totalorder %s293, 31
        %s295 = scalar_select %p294, %s293, 31
        %s296 = smul.addr %s295, 8
        %s297 = scalar_lea.vmem %s1, %s296
        %s298 = smul.u32 16, %s16
      $region52: #{discriminator_forward.1} parent=43 // pred_fallthru
        _
    $region44: #{discriminator_forward.1} parent=5 // pred_fallthru
      _
    %p299 = scmp.le.s32.totalorder 1, %s16
    %p300 = scmp.lt.s32.totalorder %s16, 3
    %p301 = pnand %p299, %p300
    %p302 = pneg %p301
    // Predicated region
    $region53: #{discriminator_forward.1} parent=5 // pred_check
      _
    $region54: #{discriminator_forward.1} parent=5 // pred_check_branch
      %304 = sbr.rel (%p301) target = $region56
    $region55: #{discriminator_forward.1} parent=5 // pred_region
      %s305 = ssub.s32 %s16, 1
      %s306 = smul.u32 16, %s21
      %p307 = scmp.lt.s32.totalorder %s306, 31
      %s308 = scalar_select %p307, %s306, 31
      %s309 = smul.addr %s308, 8
      %s310 = scalar_lea.vmem %s0, %s309
      %p311 = pneg %p42
      %p312 = pneg %p39
      %s313 = smul.u32 16, %s21
      %p314 = scmp.lt.s32.totalorder %s313, 31
      %s315 = scalar_select %p314, %s313, 31
      %s316 = smul.addr %s315, 8
      %s317 = scalar_lea.vmem %s1, %s316
      %p318 = pneg %p68
      %p319 = pneg %p65
      %p320 = pneg %p89
      %p321 = pneg %p86
      %p322 = pneg %p110
      %p323 = pneg %p107
      %p324 = pneg %p131
      %p325 = pneg %p128
      %p326 = pneg %p152
      %p327 = pneg %p149
      %p328 = pneg %p173
      %p329 = pneg %p170
      %p330 = pneg %p194
      %p331 = pneg %p191
      %p332 = pneg %p215
      %p333 = pneg %p212
      %p334 = pneg %p241
      %p335 = pneg %p238
      %p336 = scmp.lt.s32.totalorder %s21, 1
      %s337 = scalar_select %p336, %s21, 1
      %s338 = scalar_lea.vmem %s9, %s337
      %s339 = smul.u32 16, %s21
      %p340 = scmp.lt.s32.totalorder %s339, 31
      %s341 = scalar_select %p340, %s339, 31
      %s342 = smul.addr %s341, 8
      %s343 = scalar_lea.vmem %s0, %s342
      %s344 = smul.u32 16, %s21
      %s345 = smul.u32 16, %s21
      %p346 = scmp.lt.s32.totalorder %s345, 31
      %s347 = scalar_select %p346, %s345, 31
      %s348 = smul.addr %s347, 8
      %s349 = scalar_lea.vmem %s1, %s348
      %s350 = smul.u32 16, %s21
      %p351 = scmp.lt.s32.totalorder %s21, 1
      %s352 = scalar_select %p351, %s21, 1
      %s353 = scalar_lea.vmem %s9, %s352
      %v355 = vld [vmem:[%s343] sm:$0xff]
      %v356 = vld [vmem:[%s343 + $0x8] sm:$0xff]
      %v357 = vld [vmem:[%s343 + $0x10] sm:$0xff]
      %v358 = vld [vmem:[%s343 + $0x18] sm:$0xff]
      %v359 = vld [vmem:[%s343 + $0x20] sm:$0xff]
      %v360 = vld [vmem:[%s343 + $0x28] sm:$0xff]
      %v361 = vld [vmem:[%s343 + $0x30] sm:$0xff]
      %v362 = vld [vmem:[%s343 + $0x38] sm:$0xff]
      %v363 = vld [vmem:[%s343 + $0x40] sm:$0xff]
      %v364 = vld [vmem:[%s343 + $0x48] sm:$0xff]
      %v365 = vld [vmem:[%s343 + $0x50] sm:$0xff]
      %v366 = vld [vmem:[%s343 + $0x58] sm:$0xff]
      %v367 = vld [vmem:[%s343 + $0x60] sm:$0xff]
      %v368 = vld [vmem:[%s343 + $0x68] sm:$0xff]
      %v369 = vld [vmem:[%s343 + $0x70] sm:$0xff]
      %v370 = vld [vmem:[%s343 + $0x78] sm:$0xff]
      %v371 = vpack.c.bf16 %v356, %v355
      %v372 = vpack.c.bf16 %v358, %v357
      %v373 = vpack.c.bf16 %v360, %v359
      %v374 = vpack.c.bf16 %v362, %v361
      %v375 = vpack.c.bf16 %v364, %v363
      %v376 = vpack.c.bf16 %v366, %v365
      %v377 = vpack.c.bf16 %v368, %v367
      %v378 = vpack.c.bf16 %v370, %v369
      %v379 = vld [vmem:[%s349] sm:$0xff]
      %v380 = vld [vmem:[%s349 + $0x8] sm:$0xff]
      %v381 = vld [vmem:[%s349 + $0x10] sm:$0xff]
      %v382 = vld [vmem:[%s349 + $0x18] sm:$0xff]
      %v383 = vld [vmem:[%s349 + $0x20] sm:$0xff]
      %v384 = vld [vmem:[%s349 + $0x28] sm:$0xff]
      %v385 = vld [vmem:[%s349 + $0x30] sm:$0xff]
      %v386 = vld [vmem:[%s349 + $0x38] sm:$0xff]
      %v387 = vld [vmem:[%s349 + $0x40] sm:$0xff]
      %v388 = vld [vmem:[%s349 + $0x48] sm:$0xff]
      %v389 = vld [vmem:[%s349 + $0x50] sm:$0xff]
      %v390 = vld [vmem:[%s349 + $0x58] sm:$0xff]
      %v391 = vld [vmem:[%s349 + $0x60] sm:$0xff]
      %v392 = vld [vmem:[%s349 + $0x68] sm:$0xff]
      %v393 = vld [vmem:[%s349 + $0x70] sm:$0xff]
      %v394 = vld [vmem:[%s349 + $0x78] sm:$0xff]
      %v395 = vcvt.f32.s32.to.zero.pseudo %v379
      %v396 = vcvt.f32.s32.to.zero.pseudo %v380
      %v397 = vcvt.f32.s32.to.zero.pseudo %v381
      %v398 = vcvt.f32.s32.to.zero.pseudo %v382
      %v399 = vcvt.f32.s32.to.zero.pseudo %v383
      %v400 = vcvt.f32.s32.to.zero.pseudo %v384
      %v401 = vcvt.f32.s32.to.zero.pseudo %v385
      %v402 = vcvt.f32.s32.to.zero.pseudo %v386
      %v403 = vcvt.f32.s32.to.zero.pseudo %v387
      %v404 = vcvt.f32.s32.to.zero.pseudo %v388
      %v405 = vcvt.f32.s32.to.zero.pseudo %v389
      %v406 = vcvt.f32.s32.to.zero.pseudo %v390
      %v407 = vcvt.f32.s32.to.zero.pseudo %v391
      %v408 = vcvt.f32.s32.to.zero.pseudo %v392
      %v409 = vcvt.f32.s32.to.zero.pseudo %v393
      %v410 = vcvt.f32.s32.to.zero.pseudo %v394
      %v411 = vcvt.s32.f32 %v395
      %v412 = vcvt.s32.f32 %v396
      %v413 = vcvt.s32.f32 %v397
      %v414 = vcvt.s32.f32 %v398
      %v415 = vcvt.s32.f32 %v399
      %v416 = vcvt.s32.f32 %v400
      %v417 = vcvt.s32.f32 %v401
      %v418 = vcvt.s32.f32 %v402
      %v419 = vcvt.s32.f32 %v403
      %v420 = vcvt.s32.f32 %v404
      %v421 = vcvt.s32.f32 %v405
      %v422 = vcvt.s32.f32 %v406
      %v423 = vcvt.s32.f32 %v407
      %v424 = vcvt.s32.f32 %v408
      %v425 = vcvt.s32.f32 %v409
      %v426 = vcvt.s32.f32 %v410
      %v427 = vpack.c.bf16 %v412, %v411
      %v428 = vpack.c.bf16 %v414, %v413
      %v429 = vpack.c.bf16 %v416, %v415
      %v430 = vpack.c.bf16 %v418, %v417
      %v431 = vpack.c.bf16 %v420, %v419
      %v432 = vpack.c.bf16 %v422, %v421
      %v433 = vpack.c.bf16 %v424, %v423
      %v434 = vpack.c.bf16 %v426, %v425
      %v435 = vld [vmem:[%s2] sm:$0xff]
      %v436 = vld [vmem:[%s2 + $0x8] sm:$0xff]
      %v437 = vld [vmem:[%s3] sm:$0xf]
      %439 = vst [vmem:[#allocation1] ss:$4 sm:$0xff] %v437
      %v440 = vld.sshfl [vmem:[#allocation1] sm:$0xff pattern:$0x73625140]
      %v441 = vld.sshfl [vmem:[#allocation1 + $0x8] sm:$0xff pattern:$0x73625140]
      %vm442 = vcmask 31744
      %v444 = vsel %vm442, %v427, 0
      %v447 = vsel %vm442, %v428, 0
      %v450 = vsel %vm442, %v429, 0
      %v453 = vsel %vm442, %v430, 0
      %v456 = vsel %vm442, %v431, 0
      %v459 = vsel %vm442, %v432, 0
      %v462 = vsel %vm442, %v433, 0
      %v465 = vsel %vm442, %v434, 0
      %vm467 = vcmask 1041408
      %v468 = vsel %vm467, %v440, 0
      %v470 = vsel %vm467, %v441, 0
      %472 = vmatpush.bf16.msra.mxu0 0
      %473 = vmatpush.bf16.msra.mxu0 0
      %474 = vmatpush.bf16.msra.mxu0 0
      %475 = vmatpush.bf16.msra.mxu0 0
      %476 = vmatpush.bf16.msra.mxu0 0
      %477 = vmatpush.bf16.msra.mxu0 0
      %478 = vmatpush.bf16.msra.mxu0 0
      %479 = vmatpush.bf16.msra.mxu0 %v468
      %480 = vmatmul.bf16.gmra.mxu0 %v444
      %v481 = vpop.f32.mrf.mxu0
      %v482 = vadd.f32 0.0, %v481
      %v483 = vpop.f32.mrf.mxu0
      %v484 = vadd.f32 0.0, %v483
      %485 = vmatmul.bf16.gmra.mxu0 %v447
      %v486 = vpop.f32.mrf.mxu0
      %v487 = vadd.f32 0.0, %v486
      %v488 = vpop.f32.mrf.mxu0
      %v489 = vadd.f32 0.0, %v488
      %490 = vmatmul.bf16.gmra.mxu0 %v450
      %v491 = vpop.f32.mrf.mxu0
      %v492 = vadd.f32 0.0, %v491
      %v493 = vpop.f32.mrf.mxu0
      %v494 = vadd.f32 0.0, %v493
      %495 = vmatmul.bf16.gmra.mxu0 %v453
      %v496 = vpop.f32.mrf.mxu0
      %v497 = vadd.f32 0.0, %v496
      %v498 = vpop.f32.mrf.mxu0
      %v499 = vadd.f32 0.0, %v498
      %500 = vmatmul.bf16.gmra.mxu0 %v456
      %v501 = vpop.f32.mrf.mxu0
      %v502 = vadd.f32 0.0, %v501
      %v503 = vpop.f32.mrf.mxu0
      %v504 = vadd.f32 0.0, %v503
      %505 = vmatmul.bf16.gmra.mxu0 %v459
      %v506 = vpop.f32.mrf.mxu0
      %v507 = vadd.f32 0.0, %v506
      %v508 = vpop.f32.mrf.mxu0
      %v509 = vadd.f32 0.0, %v508
      %510 = vmatmul.bf16.gmra.mxu0 %v462
      %v511 = vpop.f32.mrf.mxu0
      %v512 = vadd.f32 0.0, %v511
      %v513 = vpop.f32.mrf.mxu0
      %v514 = vadd.f32 0.0, %v513
      %515 = vmatmul.bf16.gmra.mxu0 %v465
      %v516 = vpop.f32.mrf.mxu0
      %v517 = vadd.f32 0.0, %v516
      %v518 = vpop.f32.mrf.mxu0
      %v519 = vadd.f32 0.0, %v518
      %520 = vdwg.mxu0
      %521 = vmatpush.bf16.msra.mxu0 0
      %522 = vmatpush.bf16.msra.mxu0 0
      %523 = vmatpush.bf16.msra.mxu0 0
      %524 = vmatpush.bf16.msra.mxu0 0
      %525 = vmatpush.bf16.msra.mxu0 0
      %526 = vmatpush.bf16.msra.mxu0 0
      %527 = vmatpush.bf16.msra.mxu0 0
      %528 = vmatpush.bf16.msra.mxu0 %v470
      %529 = vmatmul.bf16.gmra.mxu0 %v444
      %v530 = vpop.f32.mrf.mxu0
      %v531 = vadd.f32 0.0, %v530
      %v532 = vpop.f32.mrf.mxu0
      %v533 = vadd.f32 0.0, %v532
      %534 = vmatmul.bf16.gmra.mxu0 %v447
      %v535 = vpop.f32.mrf.mxu0
      %v536 = vadd.f32 0.0, %v535
      %v537 = vpop.f32.mrf.mxu0
      %v538 = vadd.f32 0.0, %v537
      %539 = vmatmul.bf16.gmra.mxu0 %v450
      %v540 = vpop.f32.mrf.mxu0
      %v541 = vadd.f32 0.0, %v540
      %v542 = vpop.f32.mrf.mxu0
      %v543 = vadd.f32 0.0, %v542
      %544 = vmatmul.bf16.gmra.mxu0 %v453
      %v545 = vpop.f32.mrf.mxu0
      %v546 = vadd.f32 0.0, %v545
      %v547 = vpop.f32.mrf.mxu0
      %v548 = vadd.f32 0.0, %v547
      %549 = vmatmul.bf16.gmra.mxu0 %v456
      %v550 = vpop.f32.mrf.mxu0
      %v551 = vadd.f32 0.0, %v550
      %v552 = vpop.f32.mrf.mxu0
      %v553 = vadd.f32 0.0, %v552
      %554 = vmatmul.bf16.gmra.mxu0 %v459
      %v555 = vpop.f32.mrf.mxu0
      %v556 = vadd.f32 0.0, %v555
      %v557 = vpop.f32.mrf.mxu0
      %v558 = vadd.f32 0.0, %v557
      %559 = vmatmul.bf16.gmra.mxu0 %v462
      %v560 = vpop.f32.mrf.mxu0
      %v561 = vadd.f32 0.0, %v560
      %v562 = vpop.f32.mrf.mxu0
      %v563 = vadd.f32 0.0, %v562
      %564 = vmatmul.bf16.gmra.mxu0 %v465
      %v565 = vpop.f32.mrf.mxu0
      %v566 = vadd.f32 0.0, %v565
      %v567 = vpop.f32.mrf.mxu0
      %v568 = vadd.f32 0.0, %v567
      %569 = vdwg.mxu0
      %v572 = vunpack.c.l.b16 %v435
      %v573 = vunpack.c.h.b16 %v435
      %v574 = vunpack.c.l.b16 %v436
      %v575 = vunpack.c.h.b16 %v436
      %v576 = vpack.c.b16 %v574, %v572
      %v577 = vpack.c.b16 %v575, %v573
      %vm580 = vcmask 130048
      %v582 = vsel %vm580, %v371, 0
      %v585 = vsel %vm580, %v372, 0
      %v588 = vsel %vm580, %v373, 0
      %v591 = vsel %vm580, %v374, 0
      %v594 = vsel %vm580, %v375, 0
      %v597 = vsel %vm580, %v376, 0
      %v600 = vsel %vm580, %v377, 0
      %v603 = vsel %vm580, %v378, 0
      %605 = vmatpush.bf16.msra.mxu0 0
      %606 = vmatpush.bf16.msra.mxu0 0
      %607 = vmatpush.bf16.msra.mxu0 0
      %608 = vmatpush.bf16.msra.mxu0 0
      %609 = vmatpush.bf16.msra.mxu0 0
      %610 = vmatpush.bf16.msra.mxu0 0
      %611 = vmatpush.bf16.msra.mxu0 0
      %612 = vmatpush.bf16.msra.mxu0 %v576
      %613 = vmatmul.bf16.gmra.mxu0 %v582
      %v614 = vpop.f32.mrf.mxu0
      %v615 = vadd.f32 %v482, %v614
      %v616 = vpop.f32.mrf.mxu0
      %v617 = vadd.f32 %v484, %v616
      %618 = vmatmul.bf16.gmra.mxu0 %v585
      %v619 = vpop.f32.mrf.mxu0
      %v620 = vadd.f32 %v487, %v619
      %v621 = vpop.f32.mrf.mxu0
      %v622 = vadd.f32 %v489, %v621
      %623 = vmatmul.bf16.gmra.mxu0 %v588
      %v624 = vpop.f32.mrf.mxu0
      %v625 = vadd.f32 %v492, %v624
      %v626 = vpop.f32.mrf.mxu0
      %v627 = vadd.f32 %v494, %v626
      %628 = vmatmul.bf16.gmra.mxu0 %v591
      %v629 = vpop.f32.mrf.mxu0
      %v630 = vadd.f32 %v497, %v629
      %v631 = vpop.f32.mrf.mxu0
      %v632 = vadd.f32 %v499, %v631
      %633 = vmatmul.bf16.gmra.mxu0 %v594
      %v634 = vpop.f32.mrf.mxu0
      %v635 = vadd.f32 %v502, %v634
      %v636 = vpop.f32.mrf.mxu0
      %v637 = vadd.f32 %v504, %v636
      %638 = vmatmul.bf16.gmra.mxu0 %v597
      %v639 = vpop.f32.mrf.mxu0
      %v640 = vadd.f32 %v507, %v639
      %v641 = vpop.f32.mrf.mxu0
      %v642 = vadd.f32 %v509, %v641
      %643 = vmatmul.bf16.gmra.mxu0 %v600
      %v644 = vpop.f32.mrf.mxu0
      %v645 = vadd.f32 %v512, %v644
      %v646 = vpop.f32.mrf.mxu0
      %v647 = vadd.f32 %v514, %v646
      %648 = vmatmul.bf16.gmra.mxu0 %v603
      %v649 = vpop.f32.mrf.mxu0
      %v650 = vadd.f32 %v517, %v649
      %v651 = vpop.f32.mrf.mxu0
      %v652 = vadd.f32 %v519, %v651
      %653 = vdwg.mxu0
      %654 = vmatpush.bf16.msra.mxu0 0
      %655 = vmatpush.bf16.msra.mxu0 0
      %656 = vmatpush.bf16.msra.mxu0 0
      %657 = vmatpush.bf16.msra.mxu0 0
      %658 = vmatpush.bf16.msra.mxu0 0
      %659 = vmatpush.bf16.msra.mxu0 0
      %660 = vmatpush.bf16.msra.mxu0 0
      %661 = vmatpush.bf16.msra.mxu0 %v577
      %662 = vmatmul.bf16.gmra.mxu0 %v582
      %v663 = vpop.f32.mrf.mxu0
      %v664 = vadd.f32 %v531, %v663
      %v665 = vpop.f32.mrf.mxu0
      %v666 = vadd.f32 %v533, %v665
      %667 = vmatmul.bf16.gmra.mxu0 %v585
      %v668 = vpop.f32.mrf.mxu0
      %v669 = vadd.f32 %v536, %v668
      %v670 = vpop.f32.mrf.mxu0
      %v671 = vadd.f32 %v538, %v670
      %672 = vmatmul.bf16.gmra.mxu0 %v588
      %v673 = vpop.f32.mrf.mxu0
      %v674 = vadd.f32 %v541, %v673
      %v675 = vpop.f32.mrf.mxu0
      %v676 = vadd.f32 %v543, %v675
      %677 = vmatmul.bf16.gmra.mxu0 %v591
      %v678 = vpop.f32.mrf.mxu0
      %v679 = vadd.f32 %v546, %v678
      %v680 = vpop.f32.mrf.mxu0
      %v681 = vadd.f32 %v548, %v680
      %682 = vmatmul.bf16.gmra.mxu0 %v594
      %v683 = vpop.f32.mrf.mxu0
      %v684 = vadd.f32 %v551, %v683
      %v685 = vpop.f32.mrf.mxu0
      %v686 = vadd.f32 %v553, %v685
      %687 = vmatmul.bf16.gmra.mxu0 %v597
      %v688 = vpop.f32.mrf.mxu0
      %v689 = vadd.f32 %v556, %v688
      %v690 = vpop.f32.mrf.mxu0
      %v691 = vadd.f32 %v558, %v690
      %692 = vmatmul.bf16.gmra.mxu0 %v600
      %v693 = vpop.f32.mrf.mxu0
      %v694 = vadd.f32 %v561, %v693
      %v695 = vpop.f32.mrf.mxu0
      %v696 = vadd.f32 %v563, %v695
      %697 = vmatmul.bf16.gmra.mxu0 %v603
      %v698 = vpop.f32.mrf.mxu0
      %v699 = vadd.f32 %v566, %v698
      %v700 = vpop.f32.mrf.mxu0
      %v701 = vadd.f32 %v568, %v700
      %702 = vdwg.mxu0
      %v703 = vld [vmem:[%s4] sm:$0x3]
      %v705 = vperm.slane %v703, 0
      %v706 = vperm.slane %v703, 1
      %v709 = vadd.f32 %v615, %v705
      %v710 = vadd.f32 %v664, %v706
      %v711 = vadd.f32 %v617, %v705
      %v712 = vadd.f32 %v666, %v706
      %v713 = vadd.f32 %v620, %v705
      %v714 = vadd.f32 %v669, %v706
      %v715 = vadd.f32 %v622, %v705
      %v716 = vadd.f32 %v671, %v706
      %v717 = vadd.f32 %v625, %v705
      %v718 = vadd.f32 %v674, %v706
      %v719 = vadd.f32 %v627, %v705
      %v720 = vadd.f32 %v676, %v706
      %v721 = vadd.f32 %v630, %v705
      %v722 = vadd.f32 %v679, %v706
      %v723 = vadd.f32 %v632, %v705
      %v724 = vadd.f32 %v681, %v706
      %v725 = vadd.f32 %v635, %v705
      %v726 = vadd.f32 %v684, %v706
      %v727 = vadd.f32 %v637, %v705
      %v728 = vadd.f32 %v686, %v706
      %v729 = vadd.f32 %v640, %v705
      %v730 = vadd.f32 %v689, %v706
      %v731 = vadd.f32 %v642, %v705
      %v732 = vadd.f32 %v691, %v706
      %v733 = vadd.f32 %v645, %v705
      %v734 = vadd.f32 %v694, %v706
      %v735 = vadd.f32 %v647, %v705
      %v736 = vadd.f32 %v696, %v706
      %v737 = vadd.f32 %v650, %v705
      %v738 = vadd.f32 %v699, %v706
      %v739 = vadd.f32 %v652, %v705
      %v740 = vadd.f32 %v701, %v706
      %v741 = vmax.f32 %v709, 0.0
      %v742 = vmax.f32 %v710, 0.0
      %v743 = vmax.f32 %v711, 0.0
      %v744 = vmax.f32 %v712, 0.0
      %v745 = vmax.f32 %v713, 0.0
      %v746 = vmax.f32 %v714, 0.0
      %v747 = vmax.f32 %v715, 0.0
      %v748 = vmax.f32 %v716, 0.0
      %v749 = vmax.f32 %v717, 0.0
      %v750 = vmax.f32 %v718, 0.0
      %v751 = vmax.f32 %v719, 0.0
      %v752 = vmax.f32 %v720, 0.0
      %v753 = vmax.f32 %v721, 0.0
      %v754 = vmax.f32 %v722, 0.0
      %v755 = vmax.f32 %v723, 0.0
      %v756 = vmax.f32 %v724, 0.0
      %v757 = vmax.f32 %v725, 0.0
      %v758 = vmax.f32 %v726, 0.0
      %v759 = vmax.f32 %v727, 0.0
      %v760 = vmax.f32 %v728, 0.0
      %v761 = vmax.f32 %v729, 0.0
      %v762 = vmax.f32 %v730, 0.0
      %v763 = vmax.f32 %v731, 0.0
      %v764 = vmax.f32 %v732, 0.0
      %v765 = vmax.f32 %v733, 0.0
      %v766 = vmax.f32 %v734, 0.0
      %v767 = vmax.f32 %v735, 0.0
      %v768 = vmax.f32 %v736, 0.0
      %v769 = vmax.f32 %v737, 0.0
      %v770 = vmax.f32 %v738, 0.0
      %v771 = vmax.f32 %v739, 0.0
      %v772 = vmax.f32 %v740, 0.0
      %v773 = vpack.c.bf16 %v743, %v741
      %v774 = vpack.c.bf16 %v744, %v742
      %v775 = vpack.c.bf16 %v747, %v745
      %v776 = vpack.c.bf16 %v748, %v746
      %v777 = vpack.c.bf16 %v751, %v749
      %v778 = vpack.c.bf16 %v752, %v750
      %v779 = vpack.c.bf16 %v755, %v753
      %v780 = vpack.c.bf16 %v756, %v754
      %v781 = vpack.c.bf16 %v759, %v757
      %v782 = vpack.c.bf16 %v760, %v758
      %v783 = vpack.c.bf16 %v763, %v761
      %v784 = vpack.c.bf16 %v764, %v762
      %v785 = vpack.c.bf16 %v767, %v765
      %v786 = vpack.c.bf16 %v768, %v766
      %v787 = vpack.c.bf16 %v771, %v769
      %v788 = vpack.c.bf16 %v772, %v770
      %v789 = vld [vmem:[%s5] sm:$0xff]
      %v790 = vld [vmem:[%s5 + $0x8] sm:$0xff]
      %v791 = vld [vmem:[%s5 + $0x10] sm:$0xff]
      %v792 = vld [vmem:[%s5 + $0x18] sm:$0xff]
      %v793 = vld [vmem:[%s5 + $0x20] sm:$0xff]
      %v794 = vld [vmem:[%s5 + $0x28] sm:$0xff]
      %v795 = vld [vmem:[%s5 + $0x30] sm:$0xff]
      %v796 = vld [vmem:[%s5 + $0x38] sm:$0xff]
      %v797 = vld [vmem:[%s5 + $0x40] sm:$0xff]
      %v798 = vld [vmem:[%s5 + $0x48] sm:$0xff]
      %v799 = vld [vmem:[%s5 + $0x50] sm:$0xff]
      %v800 = vld [vmem:[%s5 + $0x58] sm:$0xff]
      %v801 = vld [vmem:[%s5 + $0x60] sm:$0xff]
      %v802 = vld [vmem:[%s5 + $0x68] sm:$0xff]
      %v803 = vld [vmem:[%s5 + $0x70] sm:$0xff]
      %v804 = vld [vmem:[%s5 + $0x78] sm:$0xff]
      %v805 = vld [vmem:[%s5 + $0x80] sm:$0xff]
      %v806 = vld [vmem:[%s5 + $0x88] sm:$0xff]
      %v807 = vld [vmem:[%s5 + $0x90] sm:$0xff]
      %v808 = vld [vmem:[%s5 + $0x98] sm:$0xff]
      %v809 = vld [vmem:[%s5 + $0xa0] sm:$0xff]
      %v810 = vld [vmem:[%s5 + $0xa8] sm:$0xff]
      %v811 = vld [vmem:[%s5 + $0xb0] sm:$0xff]
      %v812 = vld [vmem:[%s5 + $0xb8] sm:$0xff]
      %v813 = vld [vmem:[%s5 + $0xc0] sm:$0xff]
      %v814 = vld [vmem:[%s5 + $0xc8] sm:$0xff]
      %v815 = vld [vmem:[%s5 + $0xd0] sm:$0xff]
      %v816 = vld [vmem:[%s5 + $0xd8] sm:$0xff]
      %v817 = vld [vmem:[%s5 + $0xe0] sm:$0xff]
      %v818 = vld [vmem:[%s5 + $0xe8] sm:$0xff]
      %v819 = vld [vmem:[%s5 + $0xf0] sm:$0xff]
      %v820 = vld [vmem:[%s5 + $0xf8] sm:$0xff]
      %v821 = vld [vmem:[%s6] sm:$0x3]
      %v823 = vperm.slane %v821, 0
      %v824 = vperm.slane %v821, 1
      %v859 = vunpack.c.l.b16 %v789
      %v860 = vunpack.c.h.b16 %v789
      %v861 = vunpack.c.l.b16 %v790
      %v862 = vunpack.c.h.b16 %v790
      %v863 = vunpack.c.l.b16 %v791
      %v864 = vunpack.c.h.b16 %v791
      %v865 = vunpack.c.l.b16 %v792
      %v866 = vunpack.c.h.b16 %v792
      %v867 = vunpack.c.l.b16 %v793
      %v868 = vunpack.c.h.b16 %v793
      %v869 = vunpack.c.l.b16 %v794
      %v870 = vunpack.c.h.b16 %v794
      %v871 = vunpack.c.l.b16 %v795
      %v872 = vunpack.c.h.b16 %v795
      %v873 = vunpack.c.l.b16 %v796
      %v874 = vunpack.c.h.b16 %v796
      %v875 = vunpack.c.l.b16 %v797
      %v876 = vunpack.c.h.b16 %v797
      %v877 = vunpack.c.l.b16 %v798
      %v878 = vunpack.c.h.b16 %v798
      %v879 = vunpack.c.l.b16 %v799
      %v880 = vunpack.c.h.b16 %v799
      %v881 = vunpack.c.l.b16 %v800
      %v882 = vunpack.c.h.b16 %v800
      %v883 = vunpack.c.l.b16 %v801
      %v884 = vunpack.c.h.b16 %v801
      %v885 = vunpack.c.l.b16 %v802
      %v886 = vunpack.c.h.b16 %v802
      %v887 = vunpack.c.l.b16 %v803
      %v888 = vunpack.c.h.b16 %v803
      %v889 = vunpack.c.l.b16 %v804
      %v890 = vunpack.c.h.b16 %v804
      %v891 = vunpack.c.l.b16 %v805
      %v892 = vunpack.c.h.b16 %v805
      %v893 = vunpack.c.l.b16 %v806
      %v894 = vunpack.c.h.b16 %v806
      %v895 = vunpack.c.l.b16 %v807
      %v896 = vunpack.c.h.b16 %v807
      %v897 = vunpack.c.l.b16 %v808
      %v898 = vunpack.c.h.b16 %v808
      %v899 = vunpack.c.l.b16 %v809
      %v900 = vunpack.c.h.b16 %v809
      %v901 = vunpack.c.l.b16 %v810
      %v902 = vunpack.c.h.b16 %v810
      %v903 = vunpack.c.l.b16 %v811
      %v904 = vunpack.c.h.b16 %v811
      %v905 = vunpack.c.l.b16 %v812
      %v906 = vunpack.c.h.b16 %v812
      %v907 = vunpack.c.l.b16 %v813
      %v908 = vunpack.c.h.b16 %v813
      %v909 = vunpack.c.l.b16 %v814
      %v910 = vunpack.c.h.b16 %v814
      %v911 = vunpack.c.l.b16 %v815
      %v912 = vunpack.c.h.b16 %v815
      %v913 = vunpack.c.l.b16 %v816
      %v914 = vunpack.c.h.b16 %v816
      %v915 = vunpack.c.l.b16 %v817
      %v916 = vunpack.c.h.b16 %v817
      %v917 = vunpack.c.l.b16 %v818
      %v918 = vunpack.c.h.b16 %v818
      %v919 = vunpack.c.l.b16 %v819
      %v920 = vunpack.c.h.b16 %v819
      %v921 = vunpack.c.l.b16 %v820
      %v922 = vunpack.c.h.b16 %v820
      %v923 = vpack.c.b16 %v861, %v859
      %v924 = vpack.c.b16 %v862, %v860
      %v925 = vpack.c.b16 %v865, %v863
      %v926 = vpack.c.b16 %v866, %v864
      %v927 = vpack.c.b16 %v869, %v867
      %v928 = vpack.c.b16 %v870, %v868
      %v929 = vpack.c.b16 %v873, %v871
      %v930 = vpack.c.b16 %v874, %v872
      %v931 = vpack.c.b16 %v877, %v875
      %v932 = vpack.c.b16 %v878, %v876
      %v933 = vpack.c.b16 %v881, %v879
      %v934 = vpack.c.b16 %v882, %v880
      %v935 = vpack.c.b16 %v885, %v883
      %v936 = vpack.c.b16 %v886, %v884
      %v937 = vpack.c.b16 %v889, %v887
      %v938 = vpack.c.b16 %v890, %v888
      %v939 = vpack.c.b16 %v893, %v891
      %v940 = vpack.c.b16 %v894, %v892
      %v941 = vpack.c.b16 %v897, %v895
      %v942 = vpack.c.b16 %v898, %v896
      %v943 = vpack.c.b16 %v901, %v899
      %v944 = vpack.c.b16 %v902, %v900
      %v945 = vpack.c.b16 %v905, %v903
      %v946 = vpack.c.b16 %v906, %v904
      %v947 = vpack.c.b16 %v909, %v907
      %v948 = vpack.c.b16 %v910, %v908
      %v949 = vpack.c.b16 %v913, %v911
      %v950 = vpack.c.b16 %v914, %v912
      %v951 = vpack.c.b16 %v917, %v915
      %v952 = vpack.c.b16 %v918, %v916
      %v953 = vpack.c.b16 %v921, %v919
      %v954 = vpack.c.b16 %v922, %v920
      %987 = vmatpush.bf16.msra.mxu0 %v937
      %988 = vmatpush.bf16.msra.mxu0 %v935
      %989 = vmatpush.bf16.msra.mxu0 %v933
      %990 = vmatpush.bf16.msra.mxu0 %v931
      %991 = vmatpush.bf16.msra.mxu0 %v929
      %992 = vmatpush.bf16.msra.mxu0 %v927
      %993 = vmatpush.bf16.msra.mxu0 %v925
      %994 = vmatpush.bf16.msra.mxu0 %v923
      %995 = vmatmul.bf16.gmra.mxu0 %v773
      %v996 = vpop.f32.mrf.mxu0
      %v997 = vadd.f32 %v823, %v996
      %v998 = vpop.f32.mrf.mxu0
      %v999 = vadd.f32 %v823, %v998
      %1000 = vmatmul.bf16.gmra.mxu0 %v775
      %v1001 = vpop.f32.mrf.mxu0
      %v1002 = vadd.f32 %v823, %v1001
      %v1003 = vpop.f32.mrf.mxu0
      %v1004 = vadd.f32 %v823, %v1003
      %1005 = vmatmul.bf16.gmra.mxu0 %v777
      %v1006 = vpop.f32.mrf.mxu0
      %v1007 = vadd.f32 %v823, %v1006
      %v1008 = vpop.f32.mrf.mxu0
      %v1009 = vadd.f32 %v823, %v1008
      %1010 = vmatmul.bf16.gmra.mxu0 %v779
      %v1011 = vpop.f32.mrf.mxu0
      %v1012 = vadd.f32 %v823, %v1011
      %v1013 = vpop.f32.mrf.mxu0
      %v1014 = vadd.f32 %v823, %v1013
      %1015 = vmatmul.bf16.gmra.mxu0 %v781
      %v1016 = vpop.f32.mrf.mxu0
      %v1017 = vadd.f32 %v823, %v1016
      %v1018 = vpop.f32.mrf.mxu0
      %v1019 = vadd.f32 %v823, %v1018
      %1020 = vmatmul.bf16.gmra.mxu0 %v783
      %v1021 = vpop.f32.mrf.mxu0
      %v1022 = vadd.f32 %v823, %v1021
      %v1023 = vpop.f32.mrf.mxu0
      %v1024 = vadd.f32 %v823, %v1023
      %1025 = vmatmul.bf16.gmra.mxu0 %v785
      %v1026 = vpop.f32.mrf.mxu0
      %v1027 = vadd.f32 %v823, %v1026
      %v1028 = vpop.f32.mrf.mxu0
      %v1029 = vadd.f32 %v823, %v1028
      %1030 = vmatmul.bf16.gmra.mxu0 %v787
      %v1031 = vpop.f32.mrf.mxu0
      %v1032 = vadd.f32 %v823, %v1031
      %v1033 = vpop.f32.mrf.mxu0
      %v1034 = vadd.f32 %v823, %v1033
      %1035 = vdwg.mxu0
      %1036 = vmatpush.bf16.msra.mxu0 %v953
      %1037 = vmatpush.bf16.msra.mxu0 %v951
      %1038 = vmatpush.bf16.msra.mxu0 %v949
      %1039 = vmatpush.bf16.msra.mxu0 %v947
      %1040 = vmatpush.bf16.msra.mxu0 %v945
      %1041 = vmatpush.bf16.msra.mxu0 %v943
      %1042 = vmatpush.bf16.msra.mxu0 %v941
      %1043 = vmatpush.bf16.msra.mxu0 %v939
      %1044 = vmatmul.bf16.gmra.mxu0 %v774
      %v1045 = vpop.f32.mrf.mxu0
      %v1046 = vadd.f32 %v997, %v1045
      %v1047 = vpop.f32.mrf.mxu0
      %v1048 = vadd.f32 %v999, %v1047
      %1049 = vmatmul.bf16.gmra.mxu0 %v776
      %v1050 = vpop.f32.mrf.mxu0
      %v1051 = vadd.f32 %v1002, %v1050
      %v1052 = vpop.f32.mrf.mxu0
      %v1053 = vadd.f32 %v1004, %v1052
      %1054 = vmatmul.bf16.gmra.mxu0 %v778
      %v1055 = vpop.f32.mrf.mxu0
      %v1056 = vadd.f32 %v1007, %v1055
      %v1057 = vpop.f32.mrf.mxu0
      %v1058 = vadd.f32 %v1009, %v1057
      %1059 = vmatmul.bf16.gmra.mxu0 %v780
      %v1060 = vpop.f32.mrf.mxu0
      %v1061 = vadd.f32 %v1012, %v1060
      %v1062 = vpop.f32.mrf.mxu0
      %v1063 = vadd.f32 %v1014, %v1062
      %1064 = vmatmul.bf16.gmra.mxu0 %v782
      %v1065 = vpop.f32.mrf.mxu0
      %v1066 = vadd.f32 %v1017, %v1065
      %v1067 = vpop.f32.mrf.mxu0
      %v1068 = vadd.f32 %v1019, %v1067
      %1069 = vmatmul.bf16.gmra.mxu0 %v784
      %v1070 = vpop.f32.mrf.mxu0
      %v1071 = vadd.f32 %v1022, %v1070
      %v1072 = vpop.f32.mrf.mxu0
      %v1073 = vadd.f32 %v1024, %v1072
      %1074 = vmatmul.bf16.gmra.mxu0 %v786
      %v1075 = vpop.f32.mrf.mxu0
      %v1076 = vadd.f32 %v1027, %v1075
      %v1077 = vpop.f32.mrf.mxu0
      %v1078 = vadd.f32 %v1029, %v1077
      %1079 = vmatmul.bf16.gmra.mxu0 %v788
      %v1080 = vpop.f32.mrf.mxu0
      %v1081 = vadd.f32 %v1032, %v1080
      %v1082 = vpop.f32.mrf.mxu0
      %v1083 = vadd.f32 %v1034, %v1082
      %1084 = vdwg.mxu0
      %1085 = vmatpush.bf16.msra.mxu0 %v938
      %1086 = vmatpush.bf16.msra.mxu0 %v936
      %1087 = vmatpush.bf16.msra.mxu0 %v934
      %1088 = vmatpush.bf16.msra.mxu0 %v932
      %1089 = vmatpush.bf16.msra.mxu0 %v930
      %1090 = vmatpush.bf16.msra.mxu0 %v928
      %1091 = vmatpush.bf16.msra.mxu0 %v926
      %1092 = vmatpush.bf16.msra.mxu0 %v924
      %1093 = vmatmul.bf16.gmra.mxu0 %v773
      %v1094 = vpop.f32.mrf.mxu0
      %v1095 = vadd.f32 %v824, %v1094
      %v1096 = vpop.f32.mrf.mxu0
      %v1097 = vadd.f32 %v824, %v1096
      %1098 = vmatmul.bf16.gmra.mxu0 %v775
      %v1099 = vpop.f32.mrf.mxu0
      %v1100 = vadd.f32 %v824, %v1099
      %v1101 = vpop.f32.mrf.mxu0
      %v1102 = vadd.f32 %v824, %v1101
      %1103 = vmatmul.bf16.gmra.mxu0 %v777
      %v1104 = vpop.f32.mrf.mxu0
      %v1105 = vadd.f32 %v824, %v1104
      %v1106 = vpop.f32.mrf.mxu0
      %v1107 = vadd.f32 %v824, %v1106
      %1108 = vmatmul.bf16.gmra.mxu0 %v779
      %v1109 = vpop.f32.mrf.mxu0
      %v1110 = vadd.f32 %v824, %v1109
      %v1111 = vpop.f32.mrf.mxu0
      %v1112 = vadd.f32 %v824, %v1111
      %1113 = vmatmul.bf16.gmra.mxu0 %v781
      %v1114 = vpop.f32.mrf.mxu0
      %v1115 = vadd.f32 %v824, %v1114
      %v1116 = vpop.f32.mrf.mxu0
      %v1117 = vadd.f32 %v824, %v1116
      %1118 = vmatmul.bf16.gmra.mxu0 %v783
      %v1119 = vpop.f32.mrf.mxu0
      %v1120 = vadd.f32 %v824, %v1119
      %v1121 = vpop.f32.mrf.mxu0
      %v1122 = vadd.f32 %v824, %v1121
      %1123 = vmatmul.bf16.gmra.mxu0 %v785
      %v1124 = vpop.f32.mrf.mxu0
      %v1125 = vadd.f32 %v824, %v1124
      %v1126 = vpop.f32.mrf.mxu0
      %v1127 = vadd.f32 %v824, %v1126
      %1128 = vmatmul.bf16.gmra.mxu0 %v787
      %v1129 = vpop.f32.mrf.mxu0
      %v1130 = vadd.f32 %v824, %v1129
      %v1131 = vpop.f32.mrf.mxu0
      %v1132 = vadd.f32 %v824, %v1131
      %1133 = vdwg.mxu0
      %1134 = vmatpush.bf16.msra.mxu0 %v954
      %1135 = vmatpush.bf16.msra.mxu0 %v952
      %1136 = vmatpush.bf16.msra.mxu0 %v950
      %1137 = vmatpush.bf16.msra.mxu0 %v948
      %1138 = vmatpush.bf16.msra.mxu0 %v946
      %1139 = vmatpush.bf16.msra.mxu0 %v944
      %1140 = vmatpush.bf16.msra.mxu0 %v942
      %1141 = vmatpush.bf16.msra.mxu0 %v940
      %1142 = vmatmul.bf16.gmra.mxu0 %v774
      %v1143 = vpop.f32.mrf.mxu0
      %v1144 = vadd.f32 %v1095, %v1143
      %v1145 = vpop.f32.mrf.mxu0
      %v1146 = vadd.f32 %v1097, %v1145
      %1147 = vmatmul.bf16.gmra.mxu0 %v776
      %v1148 = vpop.f32.mrf.mxu0
      %v1149 = vadd.f32 %v1100, %v1148
      %v1150 = vpop.f32.mrf.mxu0
      %v1151 = vadd.f32 %v1102, %v1150
      %1152 = vmatmul.bf16.gmra.mxu0 %v778
      %v1153 = vpop.f32.mrf.mxu0
      %v1154 = vadd.f32 %v1105, %v1153
      %v1155 = vpop.f32.mrf.mxu0
      %v1156 = vadd.f32 %v1107, %v1155
      %1157 = vmatmul.bf16.gmra.mxu0 %v780
      %v1158 = vpop.f32.mrf.mxu0
      %v1159 = vadd.f32 %v1110, %v1158
      %v1160 = vpop.f32.mrf.mxu0
      %v1161 = vadd.f32 %v1112, %v1160
      %1162 = vmatmul.bf16.gmra.mxu0 %v782
      %v1163 = vpop.f32.mrf.mxu0
      %v1164 = vadd.f32 %v1115, %v1163
      %v1165 = vpop.f32.mrf.mxu0
      %v1166 = vadd.f32 %v1117, %v1165
      %1167 = vmatmul.bf16.gmra.mxu0 %v784
      %v1168 = vpop.f32.mrf.mxu0
      %v1169 = vadd.f32 %v1120, %v1168
      %v1170 = vpop.f32.mrf.mxu0
      %v1171 = vadd.f32 %v1122, %v1170
      %1172 = vmatmul.bf16.gmra.mxu0 %v786
      %v1173 = vpop.f32.mrf.mxu0
      %v1174 = vadd.f32 %v1125, %v1173
      %v1175 = vpop.f32.mrf.mxu0
      %v1176 = vadd.f32 %v1127, %v1175
      %1177 = vmatmul.bf16.gmra.mxu0 %v788
      %v1178 = vpop.f32.mrf.mxu0
      %v1179 = vadd.f32 %v1130, %v1178
      %v1180 = vpop.f32.mrf.mxu0
      %v1181 = vadd.f32 %v1132, %v1180
      %1182 = vdwg.mxu0
      %v1183 = vmax.f32 %v1046, 0.0
      %v1184 = vmax.f32 %v1144, 0.0
      %v1185 = vmax.f32 %v1048, 0.0
      %v1186 = vmax.f32 %v1146, 0.0
      %v1187 = vmax.f32 %v1051, 0.0
      %v1188 = vmax.f32 %v1149, 0.0
      %v1189 = vmax.f32 %v1053, 0.0
      %v1190 = vmax.f32 %v1151, 0.0
      %v1191 = vmax.f32 %v1056, 0.0
      %v1192 = vmax.f32 %v1154, 0.0
      %v1193 = vmax.f32 %v1058, 0.0
      %v1194 = vmax.f32 %v1156, 0.0
      %v1195 = vmax.f32 %v1061, 0.0
      %v1196 = vmax.f32 %v1159, 0.0
      %v1197 = vmax.f32 %v1063, 0.0
      %v1198 = vmax.f32 %v1161, 0.0
      %v1199 = vmax.f32 %v1066, 0.0
      %v1200 = vmax.f32 %v1164, 0.0
      %v1201 = vmax.f32 %v1068, 0.0
      %v1202 = vmax.f32 %v1166, 0.0
      %v1203 = vmax.f32 %v1071, 0.0
      %v1204 = vmax.f32 %v1169, 0.0
      %v1205 = vmax.f32 %v1073, 0.0
      %v1206 = vmax.f32 %v1171, 0.0
      %v1207 = vmax.f32 %v1076, 0.0
      %v1208 = vmax.f32 %v1174, 0.0
      %v1209 = vmax.f32 %v1078, 0.0
      %v1210 = vmax.f32 %v1176, 0.0
      %v1211 = vmax.f32 %v1081, 0.0
      %v1212 = vmax.f32 %v1179, 0.0
      %v1213 = vmax.f32 %v1083, 0.0
      %v1214 = vmax.f32 %v1181, 0.0
      %v1215 = vpack.c.bf16 %v1185, %v1183
      %v1216 = vpack.c.bf16 %v1186, %v1184
      %v1217 = vpack.c.bf16 %v1189, %v1187
      %v1218 = vpack.c.bf16 %v1190, %v1188
      %v1219 = vpack.c.bf16 %v1193, %v1191
      %v1220 = vpack.c.bf16 %v1194, %v1192
      %v1221 = vpack.c.bf16 %v1197, %v1195
      %v1222 = vpack.c.bf16 %v1198, %v1196
      %v1223 = vpack.c.bf16 %v1201, %v1199
      %v1224 = vpack.c.bf16 %v1202, %v1200
      %v1225 = vpack.c.bf16 %v1205, %v1203
      %v1226 = vpack.c.bf16 %v1206, %v1204
      %v1227 = vpack.c.bf16 %v1209, %v1207
      %v1228 = vpack.c.bf16 %v1210, %v1208
      %v1229 = vpack.c.bf16 %v1213, %v1211
      %v1230 = vpack.c.bf16 %v1214, %v1212
      %v1231 = vld [vmem:[%s7] sm:$0xff]
      %v1233 = vunpack.c.l.b16 %v1231
      %v1234 = vunpack.c.h.b16 %v1231
      %v1235 = vpack.c.b16 %v1233, %v1233
      %v1236 = vpack.c.b16 %v1234, %v1234
      %1239 = vmatpush.bf16.xpose.msra.mxu0 %v1229
      %1240 = vmatpush.bf16.xpose.msra.mxu0 %v1227
      %1241 = vmatpush.bf16.xpose.msra.mxu0 %v1225
      %1242 = vmatpush.bf16.xpose.msra.mxu0 %v1223
      %1243 = vmatpush.bf16.xpose.msra.mxu0 %v1221
      %1244 = vmatpush.bf16.xpose.msra.mxu0 %v1219
      %1245 = vmatpush.bf16.xpose.msra.mxu0 %v1217
      %1246 = vmatpush.bf16.xpose.msra.mxu0 %v1215
      %1247 = vmatmul.bf16.gmra.mxu0 %v1235
      %v1248 = vpop.f32.mrf.mxu0
      %v1249 = vadd.f32 0.0, %v1248
      %v1250 = vpop.f32.mrf.mxu0
      %1251 = vdwg.mxu0
      %1252 = vmatpush.bf16.xpose.msra.mxu0 %v1230
      %1253 = vmatpush.bf16.xpose.msra.mxu0 %v1228
      %1254 = vmatpush.bf16.xpose.msra.mxu0 %v1226
      %1255 = vmatpush.bf16.xpose.msra.mxu0 %v1224
      %1256 = vmatpush.bf16.xpose.msra.mxu0 %v1222
      %1257 = vmatpush.bf16.xpose.msra.mxu0 %v1220
      %1258 = vmatpush.bf16.xpose.msra.mxu0 %v1218
      %1259 = vmatpush.bf16.xpose.msra.mxu0 %v1216
      %1260 = vmatmul.bf16.gmra.mxu0 %v1236
      %v1261 = vpop.f32.mrf.mxu0
      %v1262 = vadd.f32 %v1249, %v1261
      %v1263 = vpop.f32.mrf.mxu0
      %1264 = vdwg.mxu0
      %s1265 = sld [smem:[#allocation2]]
      %v1266 = vstv %s1265
      %v1267 = vadd.f32 %v1262, %v1266
      %v1268 = vxor.u32 %v1267, 2147483648
      %v1269 = vmul.f32 %v1268, 1.442695
      %v1270 = vpow.pop %v1269
      %v1271 = vadd.f32 %v1270, 1.0
      %v1272 = vrcp.pop %v1271
      %v1273 = vmul.f32 %v1271, %v1272
      %v1274 = vsub.f32 1.0, %v1273
      %v1275 = vmul.f32 %v1272, %v1274
      %v1276 = vadd.f32 %v1272, %v1275
      %vm1277 = vweird.f32 %v1271
      %vm1278 = vweird.f32 %v1272
      %vm1279 = vmor %vm1277, %vm1278
      %v1280 = vsel %vm1279, %v1272, %v1276
      %v1281 = vand.u32 2147483647, %v1271
      %vm1282 = vcmp.eq.f32.partialorder %v1281, 8.507059e+37
      %v1283 = vand.u32 %v1271, 2147483648
      %v1284 = vor.u32 1.1754944e-38, %v1283
      %v1285 = vsel %vm1282, %v1284, %v1280
      %v1286 = vmul.f32 1.0, %v1285
      %1287 = vst [vmem:[%s353] sm:$0x1] %v1286
      %p1288 = scmp.lt.s32.totalorder %s21, 1
      %s1289 = scalar_select %p1288, %s21, 1
      %s1290 = scalar_lea.vmem %s9, %s1289
      // Predicated region
      $region57: #{discriminator_forward.1} parent=55 // pred_check
        %p1291 = pneg %p238
      $region58: #{discriminator_forward.1} parent=55 // pred_check_branch
        %1293 = sbr.rel (%p1291) target = $region60
      $region59: #{discriminator_forward.1} parent=55 // pred_region
        _
      $region60: #{discriminator_forward.1} parent=55 // pred_fallthru
        _
    $region56: #{discriminator_forward.1} parent=5 // pred_fallthru
      _
    %p1294 = scmp.le.s32.totalorder 2, %s16
    // Predicated region
    $region61: #{discriminator_forward.1} parent=5 // pred_check
      %p1295 = pneg %p1294
    $region62: #{discriminator_forward.1} parent=5 // pred_check_branch
      %1297 = sbr.rel (%p1295) target = $region64
    $region63: #{discriminator_forward.1} parent=5 // pred_region
      %s1298 = ssub.s32 %s16, 2
      // Predicated region
      $region65: #{discriminator_forward.1} parent=63 // pred_check
        %p1299 = pneg %p244
      $region66: #{discriminator_forward.1} parent=63 // pred_check_branch
        %1301 = sbr.rel (%p1299) target = $region68
      $region67: #{discriminator_forward.1} parent=63 // pred_region
        %p1302 = scmp.lt.s32.totalorder %s22, 1
        %s1303 = scalar_select %p1302, %s22, 1
        %s1304 = scalar_lea.vmem %s9, %s1303
      $region68: #{discriminator_forward.1} parent=63 // pred_fallthru
        _
    $region64: #{discriminator_forward.1} parent=5 // pred_fallthru
      _
  $region6: #{discriminator_forward.1} parent=0 // loop_footer
    %s20 = sadd.s32 1, %s16
  $region7: #{discriminator_forward.1} parent=0 // loop_footer_branch
    %15 = sbr.rel target = $region3
  $region8: #{discriminator_forward.1} parent=0 // loop_exit
    _

</llo_original>
